<compile_context>
chip_gen: v5e
topology: v5e:2x2
jax: 0.10.0
libtpu: 0.0.40
codegen_flags: <defaults>
</compile_context>

<pallas_src>
import functools

import jax
import jax.numpy as jnp
from jax.experimental import pallas as pl
from jax.experimental.pallas import tpu as pltpu


# ------------------------------- kernel -------------------------------------
def smoothnet_resblock_kernel(x_ref, w1_ref, b1_ref, w2_ref, b2_ref, o_ref, *,
                              bf16_epilogue):
    # x_ref : (tm, Cp)          w1_ref: (Cp, Hp) bf16
    # b1_ref: (1, Hp) bf16/f32  w2_ref: (Hp, Cp) bf16   b2_ref: (1, Cp) f32
    x = x_ref[...]
    xb = x.astype(jnp.bfloat16)

    # linear1 -> (dropout: identity in eval) -> leaky_relu(0.2)
    h = jnp.dot(xb, w1_ref[...], preferred_element_type=jnp.float32)
    if bf16_epilogue:
        # v6e/v7x: bf16 VPU -> bias add + LeakyReLU on the widest intermediate
        # in bf16 (halves VPU work, removes the separate f32->bf16 cast).
        h = h.astype(jnp.bfloat16) + b1_ref[...]
        h = jnp.maximum(h, 0.2 * h)                  # stays bf16 (weak scalar)
    else:
        h = h + b1_ref[...]
        h = jnp.maximum(h, 0.2 * h)
        h = h.astype(jnp.bfloat16)

    # linear2 -> (dropout: identity) -> leaky_relu(0.2)
    y = jnp.dot(h, w2_ref[...], preferred_element_type=jnp.float32)
    y = y + b2_ref[...]
    y = jnp.maximum(y, 0.2 * y)

    # residual add in f32, store in caller's dtype (full 128-lane-wide store)
    o_ref[...] = (y + x.astype(jnp.float32)).astype(o_ref.dtype)


# ------------------------------ helpers --------------------------------------
def _default_bf16_epilogue():
    """bf16 VALU exists on v6e / v7x; keep the f32 epilogue elsewhere."""
    try:
        kind = jax.devices()[0].device_kind.lower()
    except Exception:
        return False
    return ("v6" in kind) or ("v7" in kind) or ("tpu7" in kind) or ("7x" in kind)


def _packing_factor(cin, hidden):
    if (128 % cin == 0) and (cin < 128) and ((128 // cin) * max(cin, hidden) <= 512):
        return 128 // cin
    return 1


def pack_params(w1, b1, w2, b2, *, bf16_epilogue):
    """One-time parameter packing (block-diagonal weights, tiled biases)."""
    cin, hidden = w1.shape
    p = _packing_factor(cin, hidden)
    w1b = w1.astype(jnp.bfloat16)
    w2b = w2.astype(jnp.bfloat16)
    b1f = b1.astype(jnp.bfloat16 if bf16_epilogue else jnp.float32)
    b2f = b2.astype(jnp.float32)
    if p > 1:
        eye = jnp.eye(p, dtype=jnp.bfloat16)
        # W1_pk[q*Cin + c, q*H + j] = W1[c, j]; zero off-diagonal blocks.
        w1_pk = jnp.einsum('pq,ch->pcqh', eye, w1b).reshape(cin * p, hidden * p)
        # W2_pk[q*H + j, q*Cin + c] = W2[j, c]
        w2_pk = jnp.einsum('pq,hc->phqc', eye, w2b).reshape(hidden * p, cin * p)
        b1_pk = jnp.tile(b1f.reshape(1, hidden), (1, p))
        b2_pk = jnp.tile(b2f.reshape(1, cin), (1, p))
    else:
        w1_pk, w2_pk = w1b, w2b
        b1_pk = b1f.reshape(1, hidden)
        b2_pk = b2f.reshape(1, cin)
    return p, w1_pk, b1_pk, w2_pk, b2_pk


def _run_packed(x_pk, w1_pk, b1_pk, w2_pk, b2_pk, *, out_dtype, block_rows,
                bf16_epilogue):
    mp, cin_p = x_pk.shape
    hid_p = w1_pk.shape[1]

    # Row tile: large (amortize ~0.35 us/step pipeline overhead) but keep the
    # grid at >=4 steps when possible so the "parallel" axis can shard across
    # both v7x TensorCores.  Ragged last block is handled by Pallas masking.
    tm = min(int(block_rows), mp)
    if mp > 8:
        quarter = ((pl.cdiv(mp, 4) + 7) // 8) * 8
        tm = max(8, min(tm, quarter))
        tm = max(8, (tm // 8) * 8)
    grid = (pl.cdiv(mp, tm),)

    out_itemsize = jnp.dtype(out_dtype).itemsize
    cost = pl.CostEstimate(
        flops=int(4 * mp * cin_p * hid_p),
        transcendentals=0,
        bytes_accessed=int(mp * cin_p * (x_pk.dtype.itemsize + out_itemsize)
                           + 2 * cin_p * hid_p * 2),
    )

    kernel = functools.partial(smoothnet_resblock_kernel,
                               bf16_epilogue=bf16_epilogue)

    return pl.pallas_call(
        kernel,
        out_shape=jax.ShapeDtypeStruct((mp, cin_p), out_dtype),
        grid_spec=pltpu.PrefetchScalarGridSpec(
            num_scalar_prefetch=0,
            grid=grid,
            in_specs=[
                pl.BlockSpec((tm, cin_p), lambda i: (i, 0)),      # x tile
                pl.BlockSpec((cin_p, hid_p), lambda i: (0, 0)),   # W1 (resident)
                pl.BlockSpec((1, hid_p), lambda i: (0, 0)),       # b1 (resident)
                pl.BlockSpec((hid_p, cin_p), lambda i: (0, 0)),   # W2 (resident)
                pl.BlockSpec((1, cin_p), lambda i: (0, 0)),       # b2 (resident)
            ],
            out_specs=pl.BlockSpec((tm, cin_p), lambda i: (i, 0)),
        ),
        compiler_params=pltpu.CompilerParams(
            dimension_semantics=("parallel",),
            vmem_limit_bytes=48 * 1024 * 1024),
        cost_estimate=cost,
    )(x_pk, w1_pk, b1_pk, w2_pk, b2_pk)


def make_smoothnet_resblock(w1, b1, w2, b2, *, block_rows=4096,
                            bf16_epilogue=None):
    """Packs parameters once and returns `apply(x)` (eval-mode forward)."""
    if bf16_epilogue is None:
        bf16_epilogue = _default_bf16_epilogue()
    cin, hidden = w1.shape
    p, w1_pk, b1_pk, w2_pk, b2_pk = pack_params(
        w1, b1, w2, b2, bf16_epilogue=bf16_epilogue)

    w1b = w1.astype(jnp.bfloat16)
    w2b = w2.astype(jnp.bfloat16)
    b1f = b1.astype(jnp.float32)
    b2f = b2.astype(jnp.float32)

    def apply(x):
        orig_shape = x.shape
        orig_dtype = x.dtype
        assert orig_shape[-1] == cin
        x2d = x.reshape(-1, cin)
        m = x2d.shape[0]

        def run_main(rows2d):
            mp = rows2d.shape[0] // p
            x_pk = rows2d.reshape(mp, cin * p)   # pure reshape, no data move
            out = _run_packed(x_pk, w1_pk, b1_pk, w2_pk, b2_pk,
                              out_dtype=orig_dtype, block_rows=block_rows,
                              bf16_epilogue=bf16_epilogue)
            return out.reshape(mp * p, cin)

        rem = m % p
        if rem == 0:
            out2d = run_main(x2d)                # common case: zero extra copies
        else:
            # < p tail logical rows handled in plain JAX; avoids a full-array
            # pad + slice round-trip through HBM.
            m_main = m - rem
            if m_main:
                out_main = run_main(x2d[:m_main])
            else:
                out_main = jnp.zeros((0, cin), orig_dtype)
            xt = x2d[m_main:]
            ht = jnp.dot(xt.astype(jnp.bfloat16), w1b,
                         preferred_element_type=jnp.float32) + b1f
            ht = jnp.maximum(ht, 0.2 * ht)
            yt = jnp.dot(ht.astype(jnp.bfloat16), w2b,
                         preferred_element_type=jnp.float32) + b2f
            yt = jnp.maximum(yt, 0.2 * yt)
            out_tail = (yt + xt.astype(jnp.float32)).astype(orig_dtype)
            out2d = jnp.concatenate([out_main, out_tail], axis=0)

        return out2d.reshape(orig_shape)

    return apply


# ---------------- references -------------------------------------------------
def reference_forward_f32(x, w1, b1, w2, b2):
    cin = x.shape[-1]
    x2 = x.reshape(-1, cin)
    h = x2 @ w1 + b1
    h = jnp.where(h >= 0, h, 0.2 * h)
    y = h @ w2 + b2
    y = jnp.where(y >= 0, y, 0.2 * y)
    return (y + x2).reshape(x.shape)


def reference_forward_bf16(x, w1, b1, w2, b2, *, bf16_epilogue):
    # Mirrors the kernel's bf16 MXU operands (and optional bf16 epilogue).
    cin = x.shape[-1]
    x2 = x.reshape(-1, cin)
    h = jnp.dot(x2.astype(jnp.bfloat16), w1.astype(jnp.bfloat16),
                preferred_element_type=jnp.float32)
    if bf16_epilogue:
        h = h.astype(jnp.bfloat16) + b1.astype(jnp.bfloat16)
        h = jnp.maximum(h, 0.2 * h)
    else:
        h = h + b1
        h = jnp.maximum(h, 0.2 * h)
        h = h.astype(jnp.bfloat16)
    y = jnp.dot(h, w2.astype(jnp.bfloat16),
                preferred_element_type=jnp.float32) + b2
    y = jnp.maximum(y, 0.2 * y)
    return (y + x2.astype(jnp.float32)).astype(x.dtype).reshape(x.shape)


if __name__ == "__main__":
    # Small shapes consistent with the module: input (*, in_channels)
    batch, seq = 2, 8
    in_channels, hidden_channels = 32, 64

    key = jax.random.PRNGKey(0)
    kx, k1, kb1, k2, kb2 = jax.random.split(key, 5)

    x = jax.random.normal(kx, (batch, seq, in_channels), dtype=jnp.float32)

    # Deterministic parameter init (PyTorch-style uniform bounds, fixed seed).
    lim1 = 1.0 / jnp.sqrt(in_channels)
    w1 = jax.random.uniform(k1, (in_channels, hidden_channels),
                            minval=-lim1, maxval=lim1, dtype=jnp.float32)
    b1 = jax.random.uniform(kb1, (hidden_channels,),
                            minval=-lim1, maxval=lim1, dtype=jnp.float32)

    lim2 = 1.0 / jnp.sqrt(hidden_channels)
    w2 = jax.random.uniform(k2, (hidden_channels, in_channels),
                            minval=-lim2, maxval=lim2, dtype=jnp.float32)
    b2 = jax.random.uniform(kb2, (in_channels,),
                            minval=-lim2, maxval=lim2, dtype=jnp.float32)

    bf16_epi = _default_bf16_epilogue()
    forward = make_smoothnet_resblock(w1, b1, w2, b2, bf16_epilogue=bf16_epi)

    out = jax.block_until_ready(forward(x))

    assert out.shape == x.shape and out.dtype == x.dtype

    # Tight check against a reference using the same bf16 MXU operands/epilogue.
    ref_bf = reference_forward_bf16(x, w1, b1, w2, b2, bf16_epilogue=bf16_epi)
    assert jnp.allclose(out, ref_bf, atol=2e-3, rtol=2e-3), (
        float(jnp.max(jnp.abs(out - ref_bf))))

    # Loose check against the pure-f32 PyTorch-equivalent reference.
    ref_f32 = reference_forward_f32(x, w1, b1, w2, b2)
    assert jnp.allclose(out, ref_f32, atol=5e-2, rtol=5e-2), (
        float(jnp.max(jnp.abs(out - ref_f32))))

    print("KERNEL_OK")
</pallas_src>

<mosaic_0001>
module attributes {stable_mosaic.version = 11 : i64} {
  func.func @smoothnet_resblock_kernel(%arg0: i32, %arg1: memref<4x128xf32, #tpu.memory_space<vmem>>, %arg2: memref<128x256xbf16, #tpu.memory_space<vmem>>, %arg3: memref<1x256xf32, #tpu.memory_space<vmem>>, %arg4: memref<256x128xbf16, #tpu.memory_space<vmem>>, %arg5: memref<1x128xf32, #tpu.memory_space<vmem>>, %arg6: memref<4x128xf32, #tpu.memory_space<vmem>>) attributes {dimension_semantics = [#tpu.dimension_semantics<parallel>], iteration_bounds = array<i64: 1>, scalar_prefetch = 0 : i64, scratch_operands = 0 : i64, tpu.core_type = #tpu.core_type<tc>, window_params = [{transform_indices = @transform_0, window_bounds = array<i64: 4, 128>}, {pipeline_mode = #tpu.pipeline_mode<synchronous>, transform_indices = @transform_1, window_bounds = array<i64: 128, 256>}, {pipeline_mode = #tpu.pipeline_mode<synchronous>, transform_indices = @transform_2, window_bounds = array<i64: 1, 256>}, {pipeline_mode = #tpu.pipeline_mode<synchronous>, transform_indices = @transform_3, window_bounds = array<i64: 256, 128>}, {pipeline_mode = #tpu.pipeline_mode<synchronous>, transform_indices = @transform_4, window_bounds = array<i64: 1, 128>}, {transform_indices = @transform_5, window_bounds = array<i64: 4, 128>}]} {
    %c0 = arith.constant 0 : index
    %c0_0 = arith.constant 0 : index
    %0 = vector.load %arg1[%c0, %c0_0] : memref<4x128xf32, #tpu.memory_space<vmem>>, vector<4x128xf32>
    %1 = arith.truncf %0 : vector<4x128xf32> to vector<4x128xbf16>
    %c0_1 = arith.constant 0 : index
    %c0_2 = arith.constant 0 : index
    %2 = vector.load %arg2[%c0_1, %c0_2] : memref<128x256xbf16, #tpu.memory_space<vmem>>, vector<128x256xbf16>
    %cst = arith.constant dense<0.000000e+00> : vector<4x256xf32>
    %3 = tpu.matmul %1, %2, %cst {dimension_numbers = #tpu.dot_dimension_numbers<[1], [0], [0], [1], [0, 0, 1, 1], [], []>} : vector<4x128xbf16>, vector<128x256xbf16>, vector<4x256xf32> -> vector<4x256xf32>
    %c0_3 = arith.constant 0 : index
    %c0_4 = arith.constant 0 : index
    %4 = vector.load %arg3[%c0_3, %c0_4] : memref<1x256xf32, #tpu.memory_space<vmem>>, vector<1x256xf32>
    %5 = vector.broadcast %4 : vector<1x256xf32> to vector<4x256xf32>
    %6 = arith.addf %3, %5 : vector<4x256xf32>
    %cst_5 = arith.constant 2.000000e-01 : f32
    %7 = vector.broadcast %cst_5 : f32 to vector<4x256xf32>
    %8 = arith.mulf %7, %6 : vector<4x256xf32>
    %9 = arith.maximumf %6, %8 : vector<4x256xf32>
    %10 = arith.truncf %9 : vector<4x256xf32> to vector<4x256xbf16>
    %c0_6 = arith.constant 0 : index
    %c0_7 = arith.constant 0 : index
    %11 = vector.load %arg4[%c0_6, %c0_7] : memref<256x128xbf16, #tpu.memory_space<vmem>>, vector<256x128xbf16>
    %cst_8 = arith.constant dense<0.000000e+00> : vector<4x128xf32>
    %12 = tpu.matmul %10, %11, %cst_8 {dimension_numbers = #tpu.dot_dimension_numbers<[1], [0], [0], [1], [0, 0, 1, 1], [], []>} : vector<4x256xbf16>, vector<256x128xbf16>, vector<4x128xf32> -> vector<4x128xf32>
    %c0_9 = arith.constant 0 : index
    %c0_10 = arith.constant 0 : index
    %13 = vector.load %arg5[%c0_9, %c0_10] : memref<1x128xf32, #tpu.memory_space<vmem>>, vector<1x128xf32>
    %14 = vector.broadcast %13 : vector<1x128xf32> to vector<4x128xf32>
    %15 = arith.addf %12, %14 : vector<4x128xf32>
    %cst_11 = arith.constant 2.000000e-01 : f32
    %16 = vector.broadcast %cst_11 : f32 to vector<4x128xf32>
    %17 = arith.mulf %16, %15 : vector<4x128xf32>
    %18 = arith.maximumf %15, %17 : vector<4x128xf32>
    %19 = arith.addf %18, %0 : vector<4x128xf32>
    %c0_12 = arith.constant 0 : index
    %c0_13 = arith.constant 0 : index
    %20 = vector.load %arg6[%c0_12, %c0_13] : memref<4x128xf32, #tpu.memory_space<vmem>>, vector<4x128xf32>
    tpu.vector_store %arg6[%c0_12, %c0_13], %19 {strides = array<i32>} : memref<4x128xf32, #tpu.memory_space<vmem>>, vector<4x128xf32>,
    return
  }
  func.func @transform_0(%arg0: i32) -> (i32, i32) {
    %c0_i32 = arith.constant 0 : i32
    %c0_i32_0 = arith.constant 0 : i32
    return %arg0, %c0_i32 : i32, i32
  }
  func.func @transform_1(%arg0: i32) -> (i32, i32) {
    %c0_i32 = arith.constant 0 : i32
    %c0_i32_0 = arith.constant 0 : i32
    %c0_i32_1 = arith.constant 0 : i32
    return %c0_i32, %c0_i32_0 : i32, i32
  }
  func.func @transform_2(%arg0: i32) -> (i32, i32) {
    %c0_i32 = arith.constant 0 : i32
    %c0_i32_0 = arith.constant 0 : i32
    %c0_i32_1 = arith.constant 0 : i32
    return %c0_i32, %c0_i32_0 : i32, i32
  }
  func.func @transform_3(%arg0: i32) -> (i32, i32) {
    %c0_i32 = arith.constant 0 : i32
    %c0_i32_0 = arith.constant 0 : i32
    %c0_i32_1 = arith.constant 0 : i32
    return %c0_i32, %c0_i32_0 : i32, i32
  }
  func.func @transform_4(%arg0: i32) -> (i32, i32) {
    %c0_i32 = arith.constant 0 : i32
    %c0_i32_0 = arith.constant 0 : i32
    %c0_i32_1 = arith.constant 0 : i32
    return %c0_i32, %c0_i32_0 : i32, i32
  }
  func.func @transform_5(%arg0: i32) -> (i32, i32) {
    %c0_i32 = arith.constant 0 : i32
    %c0_i32_0 = arith.constant 0 : i32
    return %arg0, %c0_i32 : i32, i32
  }
}

</mosaic_0001>

<llo_original>
// kernel: tpu_custom_call.1
$region0: #{tpu_custom_call.1}
  #allocation0 [shape = 'u32[]', space=smem, size = 0x4, offset = 0x4, fixed_abs, tag = 'smem constant byte address 0x4 - core index']
  #allocation1 [shape = 'u32[72,128]{1,0:T(1,128)}', space=vmem, size = 0x9000, scoped, tag = 'internal scratch']
  %s0 = inlined_call_operand.hbm [shape: f32[4,128], index: 0, kind: input, shape index: {}]
  %s1 = inlined_call_operand.hbm [shape: bf16[128,256], index: 1, kind: input, shape index: {}]
  %s2 = inlined_call_operand.hbm [shape: f32[1,256], index: 2, kind: input, shape index: {}]
  %s3 = inlined_call_operand.hbm [shape: bf16[256,128], index: 3, kind: input, shape index: {}]
  %s4 = inlined_call_operand.vmem [shape: f32[1,128], index: 4, kind: input, shape index: {}]
  %s5 = inlined_call_operand.hbm [shape: f32[4,128], index: 5, kind: output, shape index: {}]
  %s6 = sld [smem:[#allocation0]]
  $region46: #{tpu_custom_call.1} parent=0
    _
  %s8 = ssub.s32 1, %s6
  %s9 = scalar_select 0, %s8, %s6
  $region1: #{tpu_custom_call.1} parent=0
    #allocation2 [shape = 'u8[2048]{0}', space=vmem, size = 0x800, scoped, tag = 'input window, operand 0, single buffered']
    #allocation3 [shape = 's32[1]{0}', space=sflag, size = 0x4, scoped, tag = 'scoped memory for tpu_custom_call.1']
    #allocation4 [shape = 's32[1]{0}', space=sflag, size = 0x4, scoped, tag = 'scoped memory for tpu_custom_call.1']
    #allocation5 [shape = 'u8[65536]{0}', space=vmem, size = 0x10000, scoped, tag = 'input window, operand 1, single buffered']
    #allocation6 [shape = 's32[1]{0}', space=sflag, size = 0x4, scoped, tag = 'scoped memory for tpu_custom_call.1']
    #allocation7 [shape = 'u8[1024]{0}', space=vmem, size = 0x400, scoped, tag = 'input window, operand 2, single buffered']
    #allocation8 [shape = 'u8[65536]{0}', space=vmem, size = 0x10000, scoped, tag = 'input window, operand 3, single buffered']
    #allocation9 [shape = 's32[1]{0}', space=sflag, size = 0x4, scoped, tag = 'scoped memory for tpu_custom_call.1']
    #allocation10 [shape = 'u8[2048]{0}', space=vmem, size = 0x800, scoped, tag = 'output window, operand 0, single buffered']
    %10 = vsyncpa [#allocation3], 0
    %11 = vsyncpa [#allocation6], 0
    %12 = vsyncpa [#allocation9], 0
    %13 = vsyncpa [#allocation4], 0
    // Predicated region
    $region2: #{tpu_custom_call.1} parent=1 // pred_check
      _
    $region3: #{tpu_custom_call.1} parent=1 // pred_check_branch
      %15 = sbr.rel (0) target = $region5
    $region4: #{tpu_custom_call.1} parent=1 // pred_region
      %17 = vsyncadd [#allocation3], 0
      %s19 = sshll.u32 %s0, 4
      %s20 = int_to_ptr.hbm [resolvable:$true] %s19
      %s21 = sshll.u32 [#allocation2], 4
      %s22 = int_to_ptr.vmem [resolvable:$true] %s21
      %24 = dma.hbm_to_vmem [thread:$0]  %s20, 64, %s22, [#allocation3]
    $region5: #{tpu_custom_call.1} parent=1 // pred_fallthru
      _
    // Predicated region
    $region6: #{tpu_custom_call.1} parent=1 // pred_check
      _
    $region7: #{tpu_custom_call.1} parent=1 // pred_check_branch
      %26 = sbr.rel (0) target = $region9
    $region8: #{tpu_custom_call.1} parent=1 // pred_region
      %28 = vsyncadd [#allocation6], 0
      %s29 = sshll.u32 %s1, 4
      %s30 = int_to_ptr.hbm [resolvable:$true] %s29
      %s31 = sshll.u32 [#allocation5], 4
      %s32 = int_to_ptr.vmem [resolvable:$true] %s31
      %37 = dma.hbm_to_vmem [thread:$0]  %s30, 2048, %s32, [#allocation6], 128, 128, 8
    $region9: #{tpu_custom_call.1} parent=1 // pred_fallthru
      _
    // Predicated region
    $region10: #{tpu_custom_call.1} parent=1 // pred_check
      _
    $region11: #{tpu_custom_call.1} parent=1 // pred_check_branch
      %39 = sbr.rel (0) target = $region13
    $region12: #{tpu_custom_call.1} parent=1 // pred_region
      %41 = vsyncadd [#allocation6], 0
      %s43 = sshll.u32 %s2, 4
      %s44 = int_to_ptr.hbm [resolvable:$true] %s43
      %s45 = sshll.u32 [#allocation7], 4
      %s46 = int_to_ptr.vmem [resolvable:$true] %s45
      %48 = dma.hbm_to_vmem [thread:$0]  %s44, 32, %s46, [#allocation6]
    $region13: #{tpu_custom_call.1} parent=1 // pred_fallthru
      _
    // Predicated region
    $region14: #{tpu_custom_call.1} parent=1 // pred_check
      _
    $region15: #{tpu_custom_call.1} parent=1 // pred_check_branch
      %50 = sbr.rel (0) target = $region17
    $region16: #{tpu_custom_call.1} parent=1 // pred_region
      %52 = vsyncadd [#allocation9], 0
      %s53 = sshll.u32 %s3, 4
      %s54 = int_to_ptr.hbm [resolvable:$true] %s53
      %s55 = sshll.u32 [#allocation8], 4
      %s56 = int_to_ptr.vmem [resolvable:$true] %s55
      %61 = dma.hbm_to_vmem [thread:$0]  %s54, 2048, %s56, [#allocation9], 64, 64, 4
    $region17: #{tpu_custom_call.1} parent=1 // pred_fallthru
      _
    // Predicated region
    $region18: #{tpu_custom_call.1} parent=1 // pred_check
      _
    $region19: #{tpu_custom_call.1} parent=1 // pred_check_branch
      %63 = sbr.rel (0) target = $region21
    $region20: #{tpu_custom_call.1} parent=1 // pred_region
      _
    $region21: #{tpu_custom_call.1} parent=1 // pred_fallthru
      _
    // Predicated region
    $region22: #{tpu_custom_call.1} parent=1 // pred_check
      _
    $region23: #{tpu_custom_call.1} parent=1 // pred_check_branch
      %65 = sbr.rel (0) target = $region25
    $region24: #{tpu_custom_call.1} parent=1 // pred_region
      %67 = dma.done [#allocation3], 64
    $region25: #{tpu_custom_call.1} parent=1 // pred_fallthru
      _
    // Predicated region
    $region26: #{tpu_custom_call.1} parent=1 // pred_check
      _
    $region27: #{tpu_custom_call.1} parent=1 // pred_check_branch
      %69 = sbr.rel (0) target = $region29
    $region28: #{tpu_custom_call.1} parent=1 // pred_region
      %71 = dma.done [#allocation6], 2048
    $region29: #{tpu_custom_call.1} parent=1 // pred_fallthru
      _
    // Predicated region
    $region30: #{tpu_custom_call.1} parent=1 // pred_check
      _
    $region31: #{tpu_custom_call.1} parent=1 // pred_check_branch
      %73 = sbr.rel (0) target = $region33
    $region32: #{tpu_custom_call.1} parent=1 // pred_region
      %75 = dma.done [#allocation6], 32
    $region33: #{tpu_custom_call.1} parent=1 // pred_fallthru
      _
    // Predicated region
    $region34: #{tpu_custom_call.1} parent=1 // pred_check
      _
    $region35: #{tpu_custom_call.1} parent=1 // pred_check_branch
      %77 = sbr.rel (0) target = $region37
    $region36: #{tpu_custom_call.1} parent=1 // pred_region
      %79 = dma.done [#allocation9], 2048
    $region37: #{tpu_custom_call.1} parent=1 // pred_fallthru
      _
    %v80 = vld [vmem:[#allocation2] sm:$0xf]
    %v81 = vpack.c.bf16 %v80, %v80
    %v82 = vld [vmem:[#allocation5] sm:$0xff]
    %v83 = vld [vmem:[#allocation5 + $0x8] sm:$0xff]
    %v84 = vld [vmem:[#allocation5 + $0x10] sm:$0xff]
    %v85 = vld [vmem:[#allocation5 + $0x18] sm:$0xff]
    %v86 = vld [vmem:[#allocation5 + $0x20] sm:$0xff]
    %v87 = vld [vmem:[#allocation5 + $0x28] sm:$0xff]
    %v88 = vld [vmem:[#allocation5 + $0x30] sm:$0xff]
    %v89 = vld [vmem:[#allocation5 + $0x38] sm:$0xff]
    %v90 = vld [vmem:[#allocation5 + $0x40] sm:$0xff]
    %v91 = vld [vmem:[#allocation5 + $0x48] sm:$0xff]
    %v92 = vld [vmem:[#allocation5 + $0x50] sm:$0xff]
    %v93 = vld [vmem:[#allocation5 + $0x58] sm:$0xff]
    %v94 = vld [vmem:[#allocation5 + $0x60] sm:$0xff]
    %v95 = vld [vmem:[#allocation5 + $0x68] sm:$0xff]
    %v96 = vld [vmem:[#allocation5 + $0x70] sm:$0xff]
    %v97 = vld [vmem:[#allocation5 + $0x78] sm:$0xff]
    %v98 = vld [vmem:[#allocation7] sm:$0x3]
    %v100 = vperm.slane %v98, 0
    %v101 = vperm.slane %v98, 1
    %v120 = vunpack.c.l.b16 %v82
    %v121 = vunpack.c.h.b16 %v82
    %v122 = vunpack.c.l.b16 %v83
    %v123 = vunpack.c.h.b16 %v83
    %v124 = vunpack.c.l.b16 %v84
    %v125 = vunpack.c.h.b16 %v84
    %v126 = vunpack.c.l.b16 %v85
    %v127 = vunpack.c.h.b16 %v85
    %v128 = vunpack.c.l.b16 %v86
    %v129 = vunpack.c.h.b16 %v86
    %v130 = vunpack.c.l.b16 %v87
    %v131 = vunpack.c.h.b16 %v87
    %v132 = vunpack.c.l.b16 %v88
    %v133 = vunpack.c.h.b16 %v88
    %v134 = vunpack.c.l.b16 %v89
    %v135 = vunpack.c.h.b16 %v89
    %v136 = vunpack.c.l.b16 %v90
    %v137 = vunpack.c.h.b16 %v90
    %v138 = vunpack.c.l.b16 %v91
    %v139 = vunpack.c.h.b16 %v91
    %v140 = vunpack.c.l.b16 %v92
    %v141 = vunpack.c.h.b16 %v92
    %v142 = vunpack.c.l.b16 %v93
    %v143 = vunpack.c.h.b16 %v93
    %v144 = vunpack.c.l.b16 %v94
    %v145 = vunpack.c.h.b16 %v94
    %v146 = vunpack.c.l.b16 %v95
    %v147 = vunpack.c.h.b16 %v95
    %v148 = vunpack.c.l.b16 %v96
    %v149 = vunpack.c.h.b16 %v96
    %v150 = vunpack.c.l.b16 %v97
    %v151 = vunpack.c.h.b16 %v97
    %v152 = vpack.c.b16 %v122, %v120
    %v153 = vpack.c.b16 %v123, %v121
    %v154 = vpack.c.b16 %v126, %v124
    %v155 = vpack.c.b16 %v127, %v125
    %v156 = vpack.c.b16 %v130, %v128
    %v157 = vpack.c.b16 %v131, %v129
    %v158 = vpack.c.b16 %v134, %v132
    %v159 = vpack.c.b16 %v135, %v133
    %v160 = vpack.c.b16 %v138, %v136
    %v161 = vpack.c.b16 %v139, %v137
    %v162 = vpack.c.b16 %v142, %v140
    %v163 = vpack.c.b16 %v143, %v141
    %v164 = vpack.c.b16 %v146, %v144
    %v165 = vpack.c.b16 %v147, %v145
    %v166 = vpack.c.b16 %v150, %v148
    %v167 = vpack.c.b16 %v151, %v149
    %184 = vmatpush.bf16.msra.mxu0 %v166
    %185 = vmatpush.bf16.msra.mxu0 %v164
    %186 = vmatpush.bf16.msra.mxu0 %v162
    %187 = vmatpush.bf16.msra.mxu0 %v160
    %188 = vmatpush.bf16.msra.mxu0 %v158
    %189 = vmatpush.bf16.msra.mxu0 %v156
    %190 = vmatpush.bf16.msra.mxu0 %v154
    %191 = vmatpush.bf16.msra.mxu0 %v152
    %192 = vmatmul.bf16.gmra.mxu0 %v81
    %v193 = vpop.f32.mrf.mxu0
    %v194 = vadd.f32 %v100, %v193
    %v195 = vpop.f32.mrf.mxu0
    %196 = vdwg.mxu0
    %197 = vmatpush.bf16.msra.mxu0 %v167
    %198 = vmatpush.bf16.msra.mxu0 %v165
    %199 = vmatpush.bf16.msra.mxu0 %v163
    %200 = vmatpush.bf16.msra.mxu0 %v161
    %201 = vmatpush.bf16.msra.mxu0 %v159
    %202 = vmatpush.bf16.msra.mxu0 %v157
    %203 = vmatpush.bf16.msra.mxu0 %v155
    %204 = vmatpush.bf16.msra.mxu0 %v153
    %205 = vmatmul.bf16.gmra.mxu0 %v81
    %v206 = vpop.f32.mrf.mxu0
    %v207 = vadd.f32 %v101, %v206
    %v208 = vpop.f32.mrf.mxu0
    %209 = vdwg.mxu0
    %v210 = vmul.f32 %v194, 0.2
    %v211 = vmul.f32 %v207, 0.2
    %v212 = vmax.f32 %v194, %v210
    %v213 = vmax.f32 %v207, %v211
    %v214 = vpack.c.bf16 %v212, %v212
    %v215 = vpack.c.bf16 %v213, %v213
    %v216 = vld [vmem:[#allocation8] sm:$0xf]
    %v217 = vld [vmem:[#allocation8 + $0x4] sm:$0xf]
    %v218 = vld [vmem:[#allocation8 + $0x8] sm:$0xf]
    %v219 = vld [vmem:[#allocation8 + $0xc] sm:$0xf]
    %v220 = vld [vmem:[#allocation8 + $0x10] sm:$0xf]
    %v221 = vld [vmem:[#allocation8 + $0x14] sm:$0xf]
    %v222 = vld [vmem:[#allocation8 + $0x18] sm:$0xf]
    %v223 = vld [vmem:[#allocation8 + $0x1c] sm:$0xf]
    %v224 = vld [vmem:[#allocation8 + $0x20] sm:$0xf]
    %v225 = vld [vmem:[#allocation8 + $0x24] sm:$0xf]
    %v226 = vld [vmem:[#allocation8 + $0x28] sm:$0xf]
    %v227 = vld [vmem:[#allocation8 + $0x2c] sm:$0xf]
    %v228 = vld [vmem:[#allocation8 + $0x30] sm:$0xf]
    %v229 = vld [vmem:[#allocation8 + $0x34] sm:$0xf]
    %v230 = vld [vmem:[#allocation8 + $0x38] sm:$0xf]
    %v231 = vld [vmem:[#allocation8 + $0x3c] sm:$0xf]
    %v232 = vld [vmem:[#allocation8 + $0x40] sm:$0xf]
    %v233 = vld [vmem:[#allocation8 + $0x44] sm:$0xf]
    %v234 = vld [vmem:[#allocation8 + $0x48] sm:$0xf]
    %v235 = vld [vmem:[#allocation8 + $0x4c] sm:$0xf]
    %v236 = vld [vmem:[#allocation8 + $0x50] sm:$0xf]
    %v237 = vld [vmem:[#allocation8 + $0x54] sm:$0xf]
    %v238 = vld [vmem:[#allocation8 + $0x58] sm:$0xf]
    %v239 = vld [vmem:[#allocation8 + $0x5c] sm:$0xf]
    %v240 = vld [vmem:[#allocation8 + $0x60] sm:$0xf]
    %v241 = vld [vmem:[#allocation8 + $0x64] sm:$0xf]
    %v242 = vld [vmem:[#allocation8 + $0x68] sm:$0xf]
    %v243 = vld [vmem:[#allocation8 + $0x6c] sm:$0xf]
    %v244 = vld [vmem:[#allocation8 + $0x70] sm:$0xf]
    %v245 = vld [vmem:[#allocation8 + $0x74] sm:$0xf]
    %v246 = vld [vmem:[#allocation8 + $0x78] sm:$0xf]
    %v247 = vld [vmem:[#allocation8 + $0x7c] sm:$0xf]
    %v248 = vld [vmem:[%s4] sm:$0x1]
    %v250 = vperm.slane %v248, 0
    %v284 = vunpack.c.l.b16 %v216
    %v285 = vunpack.c.l.b16 %v217
    %v286 = vunpack.c.l.b16 %v218
    %v287 = vunpack.c.l.b16 %v219
    %v288 = vunpack.c.l.b16 %v220
    %v289 = vunpack.c.l.b16 %v221
    %v290 = vunpack.c.l.b16 %v222
    %v291 = vunpack.c.l.b16 %v223
    %v292 = vunpack.c.l.b16 %v224
    %v293 = vunpack.c.l.b16 %v225
    %v294 = vunpack.c.l.b16 %v226
    %v295 = vunpack.c.l.b16 %v227
    %v296 = vunpack.c.l.b16 %v228
    %v297 = vunpack.c.l.b16 %v229
    %v298 = vunpack.c.l.b16 %v230
    %v299 = vunpack.c.l.b16 %v231
    %v300 = vunpack.c.l.b16 %v232
    %v301 = vunpack.c.l.b16 %v233
    %v302 = vunpack.c.l.b16 %v234
    %v303 = vunpack.c.l.b16 %v235
    %v304 = vunpack.c.l.b16 %v236
    %v305 = vunpack.c.l.b16 %v237
    %v306 = vunpack.c.l.b16 %v238
    %v307 = vunpack.c.l.b16 %v239
    %v308 = vunpack.c.l.b16 %v240
    %v309 = vunpack.c.l.b16 %v241
    %v310 = vunpack.c.l.b16 %v242
    %v311 = vunpack.c.l.b16 %v243
    %v312 = vunpack.c.l.b16 %v244
    %v313 = vunpack.c.l.b16 %v245
    %v314 = vunpack.c.l.b16 %v246
    %v315 = vunpack.c.l.b16 %v247
    %v316 = vpack.c.b16 %v285, %v284
    %v317 = vpack.c.b16 %v287, %v286
    %v318 = vpack.c.b16 %v289, %v288
    %v319 = vpack.c.b16 %v291, %v290
    %v320 = vpack.c.b16 %v293, %v292
    %v321 = vpack.c.b16 %v295, %v294
    %v322 = vpack.c.b16 %v297, %v296
    %v323 = vpack.c.b16 %v299, %v298
    %v324 = vpack.c.b16 %v301, %v300
    %v325 = vpack.c.b16 %v303, %v302
    %v326 = vpack.c.b16 %v305, %v304
    %v327 = vpack.c.b16 %v307, %v306
    %v328 = vpack.c.b16 %v309, %v308
    %v329 = vpack.c.b16 %v311, %v310
    %v330 = vpack.c.b16 %v313, %v312
    %v331 = vpack.c.b16 %v315, %v314
    %348 = vmatpush.bf16.msra.mxu0 %v323
    %349 = vmatpush.bf16.msra.mxu0 %v322
    %350 = vmatpush.bf16.msra.mxu0 %v321
    %351 = vmatpush.bf16.msra.mxu0 %v320
    %352 = vmatpush.bf16.msra.mxu0 %v319
    %353 = vmatpush.bf16.msra.mxu0 %v318
    %354 = vmatpush.bf16.msra.mxu0 %v317
    %355 = vmatpush.bf16.msra.mxu0 %v316
    %356 = vmatmul.bf16.gmra.mxu0 %v214
    %v357 = vpop.f32.mrf.mxu0
    %v358 = vadd.f32 %v250, %v357
    %v359 = vpop.f32.mrf.mxu0
    %360 = vdwg.mxu0
    %361 = vmatpush.bf16.msra.mxu0 %v331
    %362 = vmatpush.bf16.msra.mxu0 %v330
    %363 = vmatpush.bf16.msra.mxu0 %v329
    %364 = vmatpush.bf16.msra.mxu0 %v328
    %365 = vmatpush.bf16.msra.mxu0 %v327
    %366 = vmatpush.bf16.msra.mxu0 %v326
    %367 = vmatpush.bf16.msra.mxu0 %v325
    %368 = vmatpush.bf16.msra.mxu0 %v324
    %369 = vmatmul.bf16.gmra.mxu0 %v215
    %v370 = vpop.f32.mrf.mxu0
    %v371 = vadd.f32 %v358, %v370
    %v372 = vpop.f32.mrf.mxu0
    %373 = vdwg.mxu0
    %v374 = vmul.f32 %v371, 0.2
    %v375 = vmax.f32 %v371, %v374
    %v376 = vadd.f32 %v375, %v80
    %377 = vst [vmem:[#allocation10] sm:$0xf] %v376
    // Predicated region
    $region38: #{tpu_custom_call.1} parent=1 // pred_check
      _
    $region39: #{tpu_custom_call.1} parent=1 // pred_check_branch
      %379 = sbr.rel (0) target = $region41
    $region40: #{tpu_custom_call.1} parent=1 // pred_region
      %381 = vsyncadd [#allocation4], 0
      %s383 = sshll.u32 [#allocation10], 4
      %s384 = int_to_ptr.vmem [resolvable:$true] %s383
      %s385 = sshll.u32 %s5, 4
      %s386 = int_to_ptr.hbm [resolvable:$true] %s385
      %388 = dma.vmem_to_hbm [thread:$0]  %s384, 64, %s386, [#allocation4]
    $region41: #{tpu_custom_call.1} parent=1 // pred_fallthru
      _
    // Predicated region
    $region42: #{tpu_custom_call.1} parent=1 // pred_check
      _
    $region43: #{tpu_custom_call.1} parent=1 // pred_check_branch
      %390 = sbr.rel (0) target = $region45
    $region44: #{tpu_custom_call.1} parent=1 // pred_region
      %392 = dma.done [#allocation4], 64
    $region45: #{tpu_custom_call.1} parent=1 // pred_fallthru
      _
    %393 = vsyncpa [#allocation3], 1
    %394 = vsyncpa [#allocation6], 1
    %395 = vsyncpa [#allocation9], 1
    %396 = vsyncpa [#allocation4], 1

</llo_original>
